<compile_context>
chip_gen: v5e
topology: v5e:2x2
jax: 0.10.0
libtpu: 0.0.40
codegen_flags: <defaults>
</compile_context>

<pallas_src>
import math
import functools

import jax
import jax.numpy as jnp
from jax.experimental import pallas as pl
from jax.experimental.pallas import tpu as pltpu

_TWO_PI = 2.0 * math.pi


def _recip(x):
    # EUP approx reciprocal (otherwise-idle slot) + one Newton-Raphson refinement
    # so the result matches an exact f32 divide to ~1 ulp.
    r0 = pl.reciprocal(x, approx=True)
    return r0 * (2.0 - x * r0)


def _rgb_to_hsv_kernel(x_ref, o_ref, *, eps):
    # x_ref / o_ref: (1, 3, TR, LANE) VMEM tiles; each channel is a packed
    # (TR, LANE) slab (TR multiple of 8 sublanes, LANE multiple of 128 lanes).
    x = x_ref[...]
    r = x[0, 0]
    g = x[0, 1]
    b = x[0, 2]

    maxc = jnp.maximum(jnp.maximum(r, g), b)
    minc = jnp.minimum(jnp.minimum(r, g), b)

    v = maxc
    deltac = maxc - minc
    s = deltac * _recip(v + eps)

    # Avoid division by zero (kornia trick: substitute 1 where delta == 0).
    dc = jnp.where(deltac == 0.0, jnp.ones_like(deltac), deltac)
    inv_dc = _recip(dc)

    rc = maxc - r
    gc = maxc - g
    bc = maxc - b

    h0 = bc - gc              # max channel == R
    h1 = 2.0 * dc + rc - bc   # max channel == G
    h2 = 4.0 * dc + gc - rc   # max channel == B

    # First channel attaining the max (matches torch's cumsum/gather tie-break).
    h = jnp.where(r == maxc, h0, jnp.where(g == maxc, h1, h2))

    # h / dc is in [-1, 5]  =>  h6 in [-1/6, 5/6]; a single select-add implements
    # mod(h / (6 * dc), 1).
    h6 = h * inv_dc * (1.0 / 6.0)
    h6 = jnp.where(h6 < 0.0, h6 + 1.0, h6)
    hue = _TWO_PI * h6

    # Full lane-dense slab stores (unmasked vst).
    o_ref[0, 0] = hue
    o_ref[0, 1] = s
    o_ref[0, 2] = v


def _pick_tiling(hw: int) -> tuple[int, int]:
    """Pick (rows_per_tile, lane_width): lanes multiple of 128, rows multiple of 8.

    Targets ~1.5 MiB per (3, TR, LANE) f32 block (in + out double-buffered
    stays around ~6 MiB, inside every generation's scoped-VMEM budget),
    shrinking for small images to limit padding.
    """
    lane = 2048
    while lane > 128 and hw < lane:
        lane //= 2
    rows = 64
    while rows > 8 and hw < rows * lane:
        rows //= 2
    return rows, lane


def rgb_to_hsv(image: jax.Array, eps: float = 1e-8) -> jax.Array:
    """image: [B, 3, H, W] float in [0, 1]. Returns [B, 3, H, W] HSV (H in [0, 2pi])."""
    B, C, H, W = image.shape
    assert C == 3, "expected 3-channel RGB input"
    hw = H * W

    tile_rows, lane = _pick_tiling(hw)
    tile_elems = tile_rows * lane
    padded_hw = pl.cdiv(hw, tile_elems) * tile_elems
    n_rows = padded_hw // lane
    n_row_tiles = n_rows // tile_rows

    x = image.reshape(B, C, hw)
    if padded_hw != hw:
        x = jnp.pad(x, ((0, 0), (0, 0), (0, padded_hw - hw)))
    x = x.reshape(B, C, n_rows, lane)

    block = (1, C, tile_rows, lane)
    out = pl.pallas_call(
        functools.partial(_rgb_to_hsv_kernel, eps=eps),
        out_shape=jax.ShapeDtypeStruct((B, C, n_rows, lane), image.dtype),
        grid_spec=pltpu.PrefetchScalarGridSpec(
            num_scalar_prefetch=0,
            grid=(B, n_row_tiles),
            in_specs=[pl.BlockSpec(block, lambda b, t: (b, 0, t, 0))],
            out_specs=pl.BlockSpec(block, lambda b, t: (b, 0, t, 0)),
        ),
        compiler_params=pltpu.CompilerParams(
            dimension_semantics=("parallel", "parallel")),
    )(x)

    out = out.reshape(B, C, padded_hw)
    if padded_hw != hw:
        out = out[:, :, :hw]       # drop the zero-padded lanes
    return out.reshape(B, C, H, W)


def _rgb_to_hsv_ref(image: jax.Array, eps: float = 1e-8) -> jax.Array:
    # Pure-JAX reference (kornia semantics) for correctness checking.
    r, g, b = image[:, 0], image[:, 1], image[:, 2]
    maxc = jnp.maximum(jnp.maximum(r, g), b)
    minc = jnp.minimum(jnp.minimum(r, g), b)
    v = maxc
    deltac = maxc - minc
    s = deltac / (v + eps)
    dc = jnp.where(deltac == 0.0, 1.0, deltac)
    rc, gc, bc = maxc - r, maxc - g, maxc - b
    h0 = bc - gc
    h1 = 2.0 * dc + rc - bc
    h2 = 4.0 * dc + gc - rc
    h = jnp.where(r == maxc, h0, jnp.where(g == maxc, h1, h2))
    h = _TWO_PI * jnp.mod(h / dc / 6.0, 1.0)
    return jnp.stack([h, s, v], axis=1)


if __name__ == "__main__":
    key = jax.random.PRNGKey(0)
    x = jax.random.uniform(key, (2, 3, 16, 16), dtype=jnp.float32)

    hsv = rgb_to_hsv(x, eps=1e-8)
    hsv = jax.block_until_ready(hsv)

    ref = _rgb_to_hsv_ref(x, eps=1e-8)
    assert hsv.shape == (2, 3, 16, 16)
    # Approx reciprocal + 1 NR step keeps the result within ~1e-6 of the exact
    # divide; 1e-4 leaves ample margin.
    assert jnp.allclose(hsv, ref, atol=1e-4, rtol=1e-4), float(jnp.max(jnp.abs(hsv - ref)))

    print("KERNEL_OK")
</pallas_src>

<mosaic_0001>
module attributes {stable_mosaic.version = 11 : i64} {
  func.func @_rgb_to_hsv_kernel(%arg0: i32, %arg1: i32, %arg2: memref<1x3x8x256xf32, #tpu.memory_space<vmem>>, %arg3: memref<1x3x8x256xf32, #tpu.memory_space<vmem>>) attributes {dimension_semantics = [#tpu.dimension_semantics<parallel>, #tpu.dimension_semantics<parallel>], iteration_bounds = array<i64: 2, 1>, scalar_prefetch = 0 : i64, scratch_operands = 0 : i64, tpu.core_type = #tpu.core_type<tc>, window_params = [{transform_indices = @transform_0, window_bounds = array<i64: 1, 3, 8, 256>}, {transform_indices = @transform_1, window_bounds = array<i64: 1, 3, 8, 256>}]} {
    %c0 = arith.constant 0 : index
    %c0_0 = arith.constant 0 : index
    %c0_1 = arith.constant 0 : index
    %c0_2 = arith.constant 0 : index
    %0 = vector.load %arg2[%c0, %c0_0, %c0_1, %c0_2] : memref<1x3x8x256xf32, #tpu.memory_space<vmem>>, vector<1x3x8x256xf32>
    %1 = vector.extract_strided_slice %0 {offsets = [0, 0, 0, 0], sizes = [1, 1, 8, 256], strides = [1, 1, 1, 1]} : vector<1x3x8x256xf32> to vector<1x1x8x256xf32>
    %2 = vector.shape_cast %1 : vector<1x1x8x256xf32> to vector<8x256xf32>
    %3 = vector.extract_strided_slice %0 {offsets = [0, 1, 0, 0], sizes = [1, 1, 8, 256], strides = [1, 1, 1, 1]} : vector<1x3x8x256xf32> to vector<1x1x8x256xf32>
    %4 = vector.shape_cast %3 : vector<1x1x8x256xf32> to vector<8x256xf32>
    %5 = vector.extract_strided_slice %0 {offsets = [0, 2, 0, 0], sizes = [1, 1, 8, 256], strides = [1, 1, 1, 1]} : vector<1x3x8x256xf32> to vector<1x1x8x256xf32>
    %6 = vector.shape_cast %5 : vector<1x1x8x256xf32> to vector<8x256xf32>
    %7 = arith.maximumf %2, %4 : vector<8x256xf32>
    %8 = arith.maximumf %7, %6 : vector<8x256xf32>
    %9 = arith.minimumf %2, %4 : vector<8x256xf32>
    %10 = arith.minimumf %9, %6 : vector<8x256xf32>
    %11 = arith.subf %8, %10 : vector<8x256xf32>
    %cst = arith.constant 9.99999993E-9 : f32
    %12 = vector.broadcast %cst : f32 to vector<8x256xf32>
    %13 = arith.addf %8, %12 : vector<8x256xf32>
    %14 = tpu.reciprocal %13 {approx = true} : vector<8x256xf32> -> vector<8x256xf32>
    %15 = arith.mulf %13, %14 : vector<8x256xf32>
    %cst_3 = arith.constant 2.000000e+00 : f32
    %16 = vector.broadcast %cst_3 : f32 to vector<8x256xf32>
    %17 = arith.subf %16, %15 : vector<8x256xf32>
    %18 = arith.mulf %14, %17 : vector<8x256xf32>
    %19 = arith.mulf %11, %18 : vector<8x256xf32>
    %cst_4 = arith.constant 0.000000e+00 : f32
    %20 = vector.broadcast %cst_4 : f32 to vector<8x256xf32>
    %21 = arith.cmpf oeq, %11, %20 : vector<8x256xf32>
    %cst_5 = arith.constant 1.000000e+00 : f32
    %22 = vector.broadcast %cst_5 : f32 to vector<8x256xf32>
    %23 = arith.select %21, %22, %11 : vector<8x256xi1>, vector<8x256xf32>
    %24 = tpu.reciprocal %23 {approx = true} : vector<8x256xf32> -> vector<8x256xf32>
    %25 = arith.mulf %23, %24 : vector<8x256xf32>
    %cst_6 = arith.constant 2.000000e+00 : f32
    %26 = vector.broadcast %cst_6 : f32 to vector<8x256xf32>
    %27 = arith.subf %26, %25 : vector<8x256xf32>
    %28 = arith.mulf %24, %27 : vector<8x256xf32>
    %29 = arith.subf %8, %2 : vector<8x256xf32>
    %30 = arith.subf %8, %4 : vector<8x256xf32>
    %31 = arith.subf %8, %6 : vector<8x256xf32>
    %32 = arith.subf %31, %30 : vector<8x256xf32>
    %cst_7 = arith.constant 2.000000e+00 : f32
    %33 = vector.broadcast %cst_7 : f32 to vector<8x256xf32>
    %34 = arith.mulf %33, %23 : vector<8x256xf32>
    %35 = arith.addf %34, %29 : vector<8x256xf32>
    %36 = arith.subf %35, %31 : vector<8x256xf32>
    %cst_8 = arith.constant 4.000000e+00 : f32
    %37 = vector.broadcast %cst_8 : f32 to vector<8x256xf32>
    %38 = arith.mulf %37, %23 : vector<8x256xf32>
    %39 = arith.addf %38, %30 : vector<8x256xf32>
    %40 = arith.subf %39, %29 : vector<8x256xf32>
    %41 = arith.cmpf oeq, %2, %8 : vector<8x256xf32>
    %42 = arith.cmpf oeq, %4, %8 : vector<8x256xf32>
    %43 = arith.select %42, %36, %40 : vector<8x256xi1>, vector<8x256xf32>
    %44 = arith.select %41, %32, %43 : vector<8x256xi1>, vector<8x256xf32>
    %45 = arith.mulf %44, %28 : vector<8x256xf32>
    %cst_9 = arith.constant 0.166666672 : f32
    %46 = vector.broadcast %cst_9 : f32 to vector<8x256xf32>
    %47 = arith.mulf %45, %46 : vector<8x256xf32>
    %cst_10 = arith.constant 0.000000e+00 : f32
    %48 = vector.broadcast %cst_10 : f32 to vector<8x256xf32>
    %49 = arith.cmpf olt, %47, %48 : vector<8x256xf32>
    %cst_11 = arith.constant 1.000000e+00 : f32
    %50 = vector.broadcast %cst_11 : f32 to vector<8x256xf32>
    %51 = arith.addf %47, %50 : vector<8x256xf32>
    %52 = arith.select %49, %51, %47 : vector<8x256xi1>, vector<8x256xf32>
    %cst_12 = arith.constant 6.28318548 : f32
    %53 = vector.broadcast %cst_12 : f32 to vector<8x256xf32>
    %54 = arith.mulf %53, %52 : vector<8x256xf32>
    %c0_13 = arith.constant 0 : index
    %c0_14 = arith.constant 0 : index
    %c0_15 = arith.constant 0 : index
    %c0_16 = arith.constant 0 : index
    %55 = vector.load %arg3[%c0_13, %c0_14, %c0_15, %c0_16] : memref<1x3x8x256xf32, #tpu.memory_space<vmem>>, vector<1x1x8x256xf32>
    %56 = vector.shape_cast %55 : vector<1x1x8x256xf32> to vector<8x256xf32>
    %57 = vector.shape_cast %54 : vector<8x256xf32> to vector<1x1x8x256xf32>
    tpu.vector_store %arg3[%c0_13, %c0_14, %c0_15, %c0_16], %57 {strides = array<i32>} : memref<1x3x8x256xf32, #tpu.memory_space<vmem>>, vector<1x1x8x256xf32>,
    %c0_17 = arith.constant 0 : index
    %c1 = arith.constant 1 : index
    %c0_18 = arith.constant 0 : index
    %c0_19 = arith.constant 0 : index
    %58 = vector.load %arg3[%c0_17, %c1, %c0_18, %c0_19] : memref<1x3x8x256xf32, #tpu.memory_space<vmem>>, vector<1x1x8x256xf32>
    %59 = vector.shape_cast %58 : vector<1x1x8x256xf32> to vector<8x256xf32>
    %60 = vector.shape_cast %19 : vector<8x256xf32> to vector<1x1x8x256xf32>
    tpu.vector_store %arg3[%c0_17, %c1, %c0_18, %c0_19], %60 {strides = array<i32>} : memref<1x3x8x256xf32, #tpu.memory_space<vmem>>, vector<1x1x8x256xf32>,
    %c0_20 = arith.constant 0 : index
    %c2 = arith.constant 2 : index
    %c0_21 = arith.constant 0 : index
    %c0_22 = arith.constant 0 : index
    %61 = vector.load %arg3[%c0_20, %c2, %c0_21, %c0_22] : memref<1x3x8x256xf32, #tpu.memory_space<vmem>>, vector<1x1x8x256xf32>
    %62 = vector.shape_cast %61 : vector<1x1x8x256xf32> to vector<8x256xf32>
    %63 = vector.shape_cast %8 : vector<8x256xf32> to vector<1x1x8x256xf32>
    tpu.vector_store %arg3[%c0_20, %c2, %c0_21, %c0_22], %63 {strides = array<i32>} : memref<1x3x8x256xf32, #tpu.memory_space<vmem>>, vector<1x1x8x256xf32>,
    return
  }
  func.func @transform_0(%arg0: i32, %arg1: i32) -> (i32, i32, i32, i32) {
    %c0_i32 = arith.constant 0 : i32
    %c0_i32_0 = arith.constant 0 : i32
    %c0_i32_1 = arith.constant 0 : i32
    return %arg0, %c0_i32, %arg1, %c0_i32_0 : i32, i32, i32, i32
  }
  func.func @transform_1(%arg0: i32, %arg1: i32) -> (i32, i32, i32, i32) {
    %c0_i32 = arith.constant 0 : i32
    %c0_i32_0 = arith.constant 0 : i32
    %c0_i32_1 = arith.constant 0 : i32
    return %arg0, %c0_i32, %arg1, %c0_i32_0 : i32, i32, i32, i32
  }
}

</mosaic_0001>

<llo_original>
// kernel: tpu_custom_call.1
$region0: #{tpu_custom_call.1}
  #allocation0 [shape = 'u32[]', space=smem, size = 0x4, offset = 0x4, fixed_abs, tag = 'smem constant byte address 0x4 - core index']
  #allocation1 [shape = 'u32[72,128]{1,0:T(1,128)}', space=vmem, size = 0x9000, scoped, tag = 'internal scratch']
  %s0 = inlined_call_operand.hbm [shape: f32[2,3,8,256], index: 0, kind: input, shape index: {}]
  %s1 = inlined_call_operand.hbm [shape: f32[2,3,8,256], index: 1, kind: output, shape index: {}]
  %s2 = sld [smem:[#allocation0]]
  $region41: #{tpu_custom_call.1} parent=0
    _
  %s4 = ssub.s32 1, %s2
  %s5 = scalar_select 0, %s4, %s2
  $region1: #{tpu_custom_call.1} parent=0
    #allocation2 [shape = 'u8[49152]{0}', space=vmem, size = 0xc000, scoped, tag = 'input window, operand 0']
    #allocation3 [shape = 's32[2]{0}', space=sflag, size = 0x8, scoped, tag = 'scoped memory for tpu_custom_call.1']
    #allocation4 [shape = 's32[2]{0}', space=sflag, size = 0x8, scoped, tag = 'scoped memory for tpu_custom_call.1']
    #allocation5 [shape = 'u8[49152]{0}', space=vmem, size = 0xc000, scoped, tag = 'output window, operand 0']
    %6 = vsyncpa [#allocation3], 0
    %s7 = scalar_lea.sflag [#allocation3], 1
    %8 = vsyncpa %s7, 0
    %9 = vsyncpa [#allocation4], 0
    %s10 = scalar_lea.sflag [#allocation4], 1
    %11 = vsyncpa %s10, 0
    loop: start=0, step=1, limit=4
    $region2: #{tpu_custom_call.1} parent=1 // loop_pre_header
      _
    $region3: #{tpu_custom_call.1} parent=1 // loop_header
      %s13 = sphi 0, %s17
      %p14 = scmp.ge.s32.totalorder %s13, 4
      %s20 = sphi 0, %s32
      %s21 = sphi 0, %s28
      %s22 = sphi 0, %s20
      %s23 = sphi 0, %s21
      %s24 = sphi 0, %s22
      %s25 = sphi 0, %s23
      %s37 = sphi 0, %s39
      %s40 = sphi 0, %s37
      %s41 = sphi 0, %s40
      %s57 = sphi 0, %s41
      %s65 = sphi 0, %s67
      %s68 = sphi 0, %s65
      %s69 = sphi 0, %s68
      %s85 = sphi 0, %s69
    $region4: #{tpu_custom_call.1} parent=1 // loop_header_branch
      %16 = sbr.rel (%p14) target = $region8
    $region5: #{tpu_custom_call.1} parent=1 // loop_body
      %s18 = ssub.s32 %s13, 1
      %s19 = ssub.s32 %s13, 2
      %s26 = sadd.s32 1, %s21
      %p27 = scmp.ge.s32.totalorder %s26, 1
      %s28 = scalar_select %p27, 0, %s26
      %s29 = sadd.s32 1, %s20
      %s30 = scalar_select %p27, %s29, %s20
      %p31 = scmp.ge.s32.totalorder %s30, 2
      %s32 = scalar_select %p31, 0, %s30
      %s33 = ssub.s32 %s20, %s32
      %s34 = ssub.s32 %s21, %s28
      %s35 = sor.u32 %s33, %s34
      %p36 = scmp.eq.s32.totalorder %s35, 0
      %s38 = sadd.s32 %s37, 1
      %s39 = scalar_select %p36, %s37, %s38
      %p42 = pneg %p36
      %p43 = scmp.eq.s32.totalorder %s13, 1
      %p44 = por %p42, %p43
      %p45 = scmp.ne.s32.totalorder %s37, %s40
      %p46 = scmp.eq.s32.totalorder %s13, 0
      %p47 = por %p45, %p46
      %p48 = scmp.ne.s32.totalorder %s37, %s40
      %p49 = scmp.eq.s32.totalorder %s18, 1
      %p50 = por %p48, %p49
      %p51 = scmp.ne.s32.totalorder %s40, %s41
      %p52 = scmp.eq.s32.totalorder %s18, 0
      %p53 = por %p51, %p52
      %p54 = scmp.ne.s32.totalorder %s40, %s41
      %p55 = scmp.eq.s32.totalorder %s19, 1
      %p56 = por %p54, %p55
      %p58 = scmp.ne.s32.totalorder %s41, %s57
      %p59 = scmp.eq.s32.totalorder %s19, 0
      %p60 = por %p58, %p59
      %s61 = ssub.s32 %s20, %s32
      %s62 = ssub.s32 %s21, %s28
      %s63 = sor.u32 %s61, %s62
      %p64 = scmp.eq.s32.totalorder %s63, 0
      %s66 = sadd.s32 %s65, 1
      %s67 = scalar_select %p64, %s65, %s66
      %p70 = pneg %p64
      %p71 = scmp.eq.s32.totalorder %s13, 1
      %p72 = por %p70, %p71
      %p73 = scmp.ne.s32.totalorder %s65, %s68
      %p74 = scmp.eq.s32.totalorder %s13, 0
      %p75 = por %p73, %p74
      %p76 = scmp.ne.s32.totalorder %s65, %s68
      %p77 = scmp.eq.s32.totalorder %s18, 1
      %p78 = por %p76, %p77
      %p79 = scmp.ne.s32.totalorder %s68, %s69
      %p80 = scmp.eq.s32.totalorder %s18, 0
      %p81 = por %p79, %p80
      %p82 = scmp.ne.s32.totalorder %s68, %s69
      %p83 = scmp.eq.s32.totalorder %s19, 1
      %p84 = por %p82, %p83
      %p86 = scmp.ne.s32.totalorder %s69, %s85
      %p87 = scmp.eq.s32.totalorder %s19, 0
      %p88 = por %p86, %p87
      %p89 = scmp.le.s32.totalorder 1, %s13
      %p90 = scmp.lt.s32.totalorder %s13, 3
      %p91 = pnand %p89, %p90
      %p92 = pneg %p91
      // Predicated region
      $region9: #{tpu_custom_call.1} parent=5 // pred_check
        _
      $region10: #{tpu_custom_call.1} parent=5 // pred_check_branch
        %94 = sbr.rel (%p91) target = $region12
      $region11: #{tpu_custom_call.1} parent=5 // pred_region
        %s95 = ssub.s32 %s13, 1
      $region12: #{tpu_custom_call.1} parent=5 // pred_fallthru
        _
      %p96 = scmp.lt.s32.totalorder %s13, 2
      // Predicated region
      $region13: #{tpu_custom_call.1} parent=5 // pred_check
        %p97 = pneg %p96
      $region14: #{tpu_custom_call.1} parent=5 // pred_check_branch
        %99 = sbr.rel (%p97) target = $region16
      $region15: #{tpu_custom_call.1} parent=5 // pred_region
        // Predicated region
        $region17: #{tpu_custom_call.1} parent=15 // pred_check
          %p100 = pneg %p47
        $region18: #{tpu_custom_call.1} parent=15 // pred_check_branch
          %102 = sbr.rel (%p100) target = $region20
        $region19: #{tpu_custom_call.1} parent=15 // pred_region
          %s103 = sand.u32 %s37, 1
          %s104 = scalar_lea.sflag [#allocation3], %s103
          %s105 = sand.u32 %s37, 1
          %s106 = smul.addr %s105, 48
          %s107 = scalar_lea.vmem [#allocation2], %s106
          %109 = vsyncadd %s104, 0
          %s110 = smul.addr %s21, 2
          %s111 = smul.addr %s20, 6
          %s112 = sadd.s32 %s110, %s111
          %s113 = smul.addr %s112, 8
          %s114 = scalar_lea.hbm %s0, %s113
          %s115 = sshll.u32 %s114, 4
          %s116 = int_to_ptr.hbm [resolvable:$true] %s115
          %s117 = sshll.u32 %s107, 4
          %s118 = int_to_ptr.vmem [resolvable:$true] %s117
          %123 = dma.hbm_to_vmem [thread:$0]  %s116, 768, %s118, %s104, 256, 256, 16
        $region20: #{tpu_custom_call.1} parent=15 // pred_fallthru
          _
      $region16: #{tpu_custom_call.1} parent=5 // pred_fallthru
        _
      %p124 = scmp.le.s32.totalorder 1, %s13
      %p125 = scmp.lt.s32.totalorder %s13, 3
      %p126 = pnand %p124, %p125
      %p127 = pneg %p126
      // Predicated region
      $region21: #{tpu_custom_call.1} parent=5 // pred_check
        _
      $region22: #{tpu_custom_call.1} parent=5 // pred_check_branch
        %129 = sbr.rel (%p126) target = $region24
      $region23: #{tpu_custom_call.1} parent=5 // pred_region
        %s130 = ssub.s32 %s13, 1
        %s131 = sand.u32 %s40, 1
        %s132 = scalar_lea.sflag [#allocation3], %s131
        %s133 = sand.u32 %s40, 1
        %s134 = smul.addr %s133, 48
        %s135 = scalar_lea.vmem [#allocation2], %s134
        // Predicated region
        $region25: #{tpu_custom_call.1} parent=23 // pred_check
          %p136 = pneg %p53
        $region26: #{tpu_custom_call.1} parent=23 // pred_check_branch
          %138 = sbr.rel (%p136) target = $region28
        $region27: #{tpu_custom_call.1} parent=23 // pred_region
          %140 = dma.done %s132, 768
        $region28: #{tpu_custom_call.1} parent=23 // pred_fallthru
          _
        %s141 = sand.u32 %s40, 1
        %s142 = scalar_lea.sflag [#allocation3], %s141
        %s143 = sand.u32 %s40, 1
        %s144 = smul.addr %s143, 48
        %s145 = scalar_lea.vmem [#allocation2], %s144
        %p146 = pneg %p53
        %p147 = pneg %p50
        %p148 = pneg %p81
        %p149 = pneg %p78
        %s150 = sand.u32 %s68, 1
        %s151 = scalar_lea.sflag [#allocation4], %s150
        %s152 = sand.u32 %s68, 1
        %s153 = smul.addr %s152, 48
        %s154 = scalar_lea.vmem [#allocation5], %s153
        %v155 = vld [vmem:[%s135] sm:$0xff]
        %v156 = vld [vmem:[%s135 + $0x8] sm:$0xff]
        %v157 = vld [vmem:[%s135 + $0x10] sm:$0xff]
        %v158 = vld [vmem:[%s135 + $0x18] sm:$0xff]
        %v159 = vld [vmem:[%s135 + $0x20] sm:$0xff]
        %v160 = vld [vmem:[%s135 + $0x28] sm:$0xff]
        %v161 = vmax.f32 %v155, %v157
        %v162 = vmax.f32 %v156, %v158
        %v163 = vmax.f32 %v161, %v159
        %v164 = vmax.f32 %v162, %v160
        %v165 = vmin.f32 %v155, %v157
        %v166 = vmin.f32 %v156, %v158
        %v167 = vmin.f32 %v165, %v159
        %v168 = vmin.f32 %v166, %v160
        %v169 = vsub.f32 %v163, %v167
        %v170 = vsub.f32 %v164, %v168
        %v171 = vadd.f32 %v163, 1e-08
        %v172 = vadd.f32 %v164, 1e-08
        %v173 = vrcp.pop %v171
        %v174 = vrcp.pop %v172
        %v175 = vmul.f32 %v171, %v173
        %v176 = vmul.f32 %v172, %v174
        %v177 = vsub.f32 2.0, %v175
        %v178 = vsub.f32 2.0, %v176
        %v179 = vmul.f32 %v173, %v177
        %v180 = vmul.f32 %v174, %v178
        %v181 = vmul.f32 %v169, %v179
        %v182 = vmul.f32 %v170, %v180
        %vm183 = vcmp.eq.f32.partialorder %v169, 0.0
        %vm184 = vcmp.eq.f32.partialorder %v170, 0.0
        %v185 = vsel %vm183, 1.0, %v169
        %v186 = vsel %vm184, 1.0, %v170
        %v187 = vrcp.pop %v185
        %v188 = vrcp.pop %v186
        %v189 = vmul.f32 %v185, %v187
        %v190 = vmul.f32 %v186, %v188
        %v191 = vsub.f32 2.0, %v189
        %v192 = vsub.f32 2.0, %v190
        %v193 = vmul.f32 %v187, %v191
        %v194 = vmul.f32 %v188, %v192
        %v195 = vsub.f32 %v163, %v155
        %v196 = vsub.f32 %v164, %v156
        %v197 = vsub.f32 %v163, %v157
        %v198 = vsub.f32 %v164, %v158
        %v199 = vsub.f32 %v163, %v159
        %v200 = vsub.f32 %v164, %v160
        %v201 = vsub.f32 %v199, %v197
        %v202 = vsub.f32 %v200, %v198
        %v203 = vmul.f32 %v185, 2.0
        %v204 = vmul.f32 %v186, 2.0
        %v205 = vadd.f32 %v203, %v195
        %v206 = vadd.f32 %v204, %v196
        %v207 = vsub.f32 %v205, %v199
        %v208 = vsub.f32 %v206, %v200
        %v209 = vmul.f32 %v185, 4.0
        %v210 = vmul.f32 %v186, 4.0
        %v211 = vadd.f32 %v209, %v197
        %v212 = vadd.f32 %v210, %v198
        %v213 = vsub.f32 %v211, %v195
        %v214 = vsub.f32 %v212, %v196
        %vm215 = vcmp.eq.f32.partialorder %v155, %v163
        %vm216 = vcmp.eq.f32.partialorder %v156, %v164
        %vm217 = vcmp.eq.f32.partialorder %v157, %v163
        %vm218 = vcmp.eq.f32.partialorder %v158, %v164
        %v219 = vsel %vm217, %v207, %v213
        %v220 = vsel %vm218, %v208, %v214
        %v221 = vsel %vm215, %v201, %v219
        %v222 = vsel %vm216, %v202, %v220
        %v223 = vmul.f32 %v221, %v193
        %v224 = vmul.f32 %v222, %v194
        %v225 = vmul.f32 %v223, 0.16666667
        %v226 = vmul.f32 %v224, 0.16666667
        %vm227 = vcmp.lt.f32.partialorder %v225, 0.0
        %vm228 = vcmp.lt.f32.partialorder %v226, 0.0
        %v229 = vadd.f32 %v225, 1.0
        %v230 = vadd.f32 %v226, 1.0
        %v231 = vsel %vm227, %v229, %v225
        %v232 = vsel %vm228, %v230, %v226
        %v233 = vmul.f32 %v231, 6.2831855
        %v234 = vmul.f32 %v232, 6.2831855
        %235 = vst [vmem:[%s154] sm:$0xff] %v233
        %236 = vst [vmem:[%s154 + $0x8] sm:$0xff] %v234
        %s237 = scalar_lea.vmem %s154, 16 [#allocation5]
        %238 = vst [vmem:[%s237] sm:$0xff] %v181
        %239 = vst [vmem:[%s237 + $0x8] sm:$0xff] %v182
        %s240 = scalar_lea.vmem %s154, 32 [#allocation5]
        %241 = vst [vmem:[%s240] sm:$0xff] %v163
        %242 = vst [vmem:[%s240 + $0x8] sm:$0xff] %v164
        %s243 = sand.u32 %s68, 1
        %s244 = scalar_lea.sflag [#allocation4], %s243
        %s245 = sand.u32 %s68, 1
        %s246 = smul.addr %s245, 48
        %s247 = scalar_lea.vmem [#allocation5], %s246
        // Predicated region
        $region29: #{tpu_custom_call.1} parent=23 // pred_check
          %p248 = pneg %p78
        $region30: #{tpu_custom_call.1} parent=23 // pred_check_branch
          %250 = sbr.rel (%p248) target = $region32
        $region31: #{tpu_custom_call.1} parent=23 // pred_region
          %252 = vsyncadd %s244, 0
          %s253 = smul.addr %s23, 2
          %s254 = smul.addr %s22, 6
          %s255 = sadd.s32 %s253, %s254
          %s256 = smul.addr %s255, 8
          %s257 = scalar_lea.hbm %s1, %s256
          %s258 = sshll.u32 %s247, 4
          %s259 = int_to_ptr.vmem [resolvable:$true] %s258
          %s260 = sshll.u32 %s257, 4
          %s261 = int_to_ptr.hbm [resolvable:$true] %s260
          %266 = dma.vmem_to_hbm [thread:$0]  %s259, 768, %s261, %s244, 256, 256, 16
        $region32: #{tpu_custom_call.1} parent=23 // pred_fallthru
          _
      $region24: #{tpu_custom_call.1} parent=5 // pred_fallthru
        _
      %p267 = scmp.le.s32.totalorder 2, %s13
      // Predicated region
      $region33: #{tpu_custom_call.1} parent=5 // pred_check
        %p268 = pneg %p267
      $region34: #{tpu_custom_call.1} parent=5 // pred_check_branch
        %270 = sbr.rel (%p268) target = $region36
      $region35: #{tpu_custom_call.1} parent=5 // pred_region
        %s271 = ssub.s32 %s13, 2
        // Predicated region
        $region37: #{tpu_custom_call.1} parent=35 // pred_check
          %p272 = pneg %p84
        $region38: #{tpu_custom_call.1} parent=35 // pred_check_branch
          %274 = sbr.rel (%p272) target = $region40
        $region39: #{tpu_custom_call.1} parent=35 // pred_region
          %s275 = sand.u32 %s69, 1
          %s276 = scalar_lea.sflag [#allocation4], %s275
          %s277 = sand.u32 %s69, 1
          %s278 = smul.addr %s277, 48
          %s279 = scalar_lea.vmem [#allocation5], %s278
          %281 = dma.done %s276, 768
        $region40: #{tpu_custom_call.1} parent=35 // pred_fallthru
          _
      $region36: #{tpu_custom_call.1} parent=5 // pred_fallthru
        _
    $region6: #{tpu_custom_call.1} parent=1 // loop_footer
      %s17 = sadd.s32 1, %s13
    $region7: #{tpu_custom_call.1} parent=1 // loop_footer_branch
      %12 = sbr.rel target = $region3
    $region8: #{tpu_custom_call.1} parent=1 // loop_exit
      _
    %282 = vsyncpa [#allocation3], 1
    %s283 = scalar_lea.sflag [#allocation3], 1
    %284 = vsyncpa %s283, 1
    %285 = vsyncpa [#allocation4], 1
    %s286 = scalar_lea.sflag [#allocation4], 1
    %287 = vsyncpa %s286, 1

</llo_original>
